<compile_context>
chip_gen: v7x
topology: tpu7x:2x2x1
jax: 0.10.0
libtpu: 0.0.40
codegen_flags: <defaults>
</compile_context>

<pallas_src>
import functools

import jax
import jax.numpy as jnp
from jax.experimental import pallas as pl
from jax.experimental.pallas import tpu as pltpu

# ----- model hyper-parameters (match FCNet defaults) -------------------------
INPUT_DIM = 2
OUTPUT_DIM = 1
N_HIDDEN_LAYERS = 6          # -> 5 hidden Linear(neurons, neurons) layers
NEURONS = 16

LANES = 128                  # vreg lane width
PACK = LANES // NEURONS      # 8 samples packed side-by-side per row
HID_LANES = PACK * NEURONS   # 128 packed-hidden lane width
TM_MAX = 512                 # max rows per grid step (= 4096 samples per step)


def _round_up(x, m):
    return ((x + m - 1) // m) * m


def _fcnet_kernel(x_ref, w_in_ref, b_in_ref, w_hid_ref, b_hid_ref,
                  w_out_ref, b_out_ref, o_ref, *, n_hidden):
    """One batch tile (TM rows x PACK samples/row) of the full MLP forward."""
    cdt = w_in_ref.dtype                      # matmul operand dtype (f32 or bf16)
    x = x_ref[...].astype(cdt)                # (TM, PACK*input_dim) packed input
    # input layer + tanh (fp32 MXU accumulate, fp32 bias add + tanh)
    h = jnp.tanh(
        jnp.dot(x, w_in_ref[...], preferred_element_type=jnp.float32)
        + b_in_ref[...]
    )
    # hidden layers + tanh (static unrolled loop, n_hidden-1 layers)
    for k in range(n_hidden - 1):
        h = jnp.tanh(
            jnp.dot(h.astype(cdt), w_hid_ref[k],
                    preferred_element_type=jnp.float32)
            + b_hid_ref[k]
        )
    # output layer (no activation), packed to PACK*output_dim lanes
    o_ref[...] = (
        jnp.dot(h.astype(cdt), w_out_ref[...],
                preferred_element_type=jnp.float32)
        + b_out_ref[...]
    ).astype(o_ref.dtype)


def init_params(key, input_dim=INPUT_DIM, output_dim=OUTPUT_DIM,
                n_hidden_layers=N_HIDDEN_LAYERS, neurons=NEURONS):
    """torch.nn.Linear-style init (U[-1/sqrt(fan_in), 1/sqrt(fan_in)]).

    Returns *raw* (unpacked) weights in (in_features, out_features) layout."""
    assert n_hidden_layers >= 2
    keys = jax.random.split(key, 2 * (n_hidden_layers + 1))
    ki = iter(keys)

    def linear(in_f, out_f):
        bound = 1.0 / (in_f ** 0.5)
        w = jax.random.uniform(next(ki), (in_f, out_f), jnp.float32, -bound, bound)
        b = jax.random.uniform(next(ki), (out_f,), jnp.float32, -bound, bound)
        return w, b

    w_in, b_in = linear(input_dim, neurons)
    w_hid, b_hid = [], []
    for _ in range(n_hidden_layers - 1):
        w, b = linear(neurons, neurons)
        w_hid.append(w)
        b_hid.append(b)
    w_out, b_out = linear(neurons, output_dim)
    return dict(w_in=w_in, b_in=b_in, w_hid=w_hid, b_hid=b_hid,
                w_out=w_out, b_out=b_out)


def pack_params(raw, compute_dtype=jnp.float32):
    """Block-diagonal kron(I_PACK, W) weights for the lane-packed kernel.

    Weights are cast to `compute_dtype` (matmul operands, bf16 recommended on
    v6e/v7x); biases stay fp32 (bias add + tanh stay fp32 in the kernel)."""
    eye = jnp.eye(PACK, dtype=jnp.float32)

    def bd(w):                                # (a, b) -> (PACK*a, PACK*b)
        return jnp.kron(eye, w).astype(compute_dtype)

    def tile_b(b):                            # (f,) -> (1, PACK*f), fp32
        return jnp.tile(b.astype(jnp.float32), PACK).reshape(1, -1)

    return dict(
        w_in=bd(raw["w_in"]),                                 # (PACK*in,  128)
        b_in=tile_b(raw["b_in"]),                             # (1, 128)
        w_hid=jnp.stack([bd(w) for w in raw["w_hid"]]),       # (L-1, 128, 128)
        b_hid=jnp.stack([tile_b(b) for b in raw["b_hid"]]),   # (L-1, 1, 128)
        w_out=bd(raw["w_out"]),                               # (128, PACK*out)
        b_out=tile_b(raw["b_out"]),                           # (1, PACK*out)
    )


def fcnet_forward(invar, packed, *, input_dim=INPUT_DIM, output_dim=OUTPUT_DIM,
                  n_hidden_layers=N_HIDDEN_LAYERS):
    """invar: dict of (N, d_k) arrays, hstacked along the feature axis (torch.hstack)."""
    x = jnp.concatenate([invar[key] for key in invar], axis=1)   # (N, input_dim)
    assert x.shape[1] == input_dim
    n = x.shape[0]

    # --- lane-pack the batch: PACK samples per 128-lane row -----------------
    rows = pl.cdiv(n, PACK)
    # Batch tile: as large as possible (amortize ~0.35us per-grid-step overhead)
    # while keeping the grid at >= 2 steps when there is enough work (v7x 2 TCs).
    tm = max(8, min(TM_MAX, _round_up(pl.cdiv(rows, 2), 8)))
    rows_pad = _round_up(rows, tm)
    n_pad = rows_pad * PACK

    x_flat = jnp.zeros((n_pad, input_dim), jnp.float32)
    x_flat = x_flat.at[:n].set(x.astype(jnp.float32))
    # sample 8r+g, feature c  ->  row r, lane g*input_dim + c
    x_packed = x_flat.reshape(rows_pad, PACK * input_dim)

    n_hid = packed["w_hid"].shape[0]                             # = n_hidden_layers - 1
    kernel = functools.partial(_fcnet_kernel, n_hidden=n_hidden_layers)

    out_packed = pl.pallas_call(
        kernel,
        out_shape=jax.ShapeDtypeStruct((rows_pad, PACK * output_dim), jnp.float32),
        grid_spec=pltpu.PrefetchScalarGridSpec(
            num_scalar_prefetch=0,
            grid=(rows_pad // tm,),
            in_specs=[
                pl.BlockSpec((tm, PACK * input_dim), lambda i: (i, 0)),           # x tile
                # Weights/biases: constant index maps -> VMEM-resident, DMA'd once.
                pl.BlockSpec((PACK * input_dim, HID_LANES), lambda i: (0, 0)),    # w_in
                pl.BlockSpec((1, HID_LANES), lambda i: (0, 0)),                   # b_in
                pl.BlockSpec((n_hid, HID_LANES, HID_LANES), lambda i: (0, 0, 0)), # w_hid
                pl.BlockSpec((n_hid, 1, HID_LANES), lambda i: (0, 0, 0)),         # b_hid
                pl.BlockSpec((HID_LANES, PACK * output_dim), lambda i: (0, 0)),   # w_out
                pl.BlockSpec((1, PACK * output_dim), lambda i: (0, 0)),           # b_out
            ],
            out_specs=pl.BlockSpec((tm, PACK * output_dim), lambda i: (i, 0)),
        ),
        compiler_params=pltpu.CompilerParams(
            dimension_semantics=("parallel",)),
    )(x_packed, packed["w_in"], packed["b_in"], packed["w_hid"],
      packed["b_hid"], packed["w_out"], packed["b_out"])

    # de-interleave: row r, lane group g  ->  sample 8r+g ; drop batch padding
    return out_packed.reshape(rows_pad * PACK, output_dim)[:n]


def fcnet_reference(invar, raw):
    """Pure-JAX reference using the raw (unpacked) parameters."""
    x = jnp.concatenate([invar[key] for key in invar], axis=1).astype(jnp.float32)
    h = jnp.tanh(x @ raw["w_in"] + raw["b_in"])
    for w, b in zip(raw["w_hid"], raw["b_hid"]):
        h = jnp.tanh(h @ w + b)
    return h @ raw["w_out"] + raw["b_out"]


if __name__ == "__main__":
    key = jax.random.PRNGKey(0)
    k_param, k_x, k_y = jax.random.split(key, 3)

    raw = init_params(k_param)
    packed_f32 = pack_params(raw, jnp.float32)
    packed_bf16 = pack_params(raw, jnp.bfloat16)   # fast path for v6e / v7x MXU

    # Helmholtz-2D style input dict: coordinates x, y of shape (N, 1).
    # N deliberately NOT a multiple of PACK(=8) to exercise pad / de-interleave.
    N = 37
    invar = {
        "x": jax.random.uniform(k_x, (N, 1), jnp.float32, -1.0, 1.0),
        "y": jax.random.uniform(k_y, (N, 1), jnp.float32, -1.0, 1.0),
    }

    ref = fcnet_reference(invar, raw)

    # fp32-operand kernel: tight correctness gate.
    out32 = jax.block_until_ready(fcnet_forward(invar, packed_f32))
    assert out32.shape == (N, OUTPUT_DIM), out32.shape
    assert jnp.allclose(out32, ref, atol=1e-5, rtol=1e-5), \
        float(jnp.max(jnp.abs(out32 - ref)))

    # bf16-operand kernel (fp32 accumulate / bias / tanh): loose tolerance.
    out16 = jax.block_until_ready(fcnet_forward(invar, packed_bf16))
    assert out16.shape == (N, OUTPUT_DIM), out16.shape
    assert jnp.allclose(out16, ref, atol=1e-1, rtol=1e-1), \
        float(jnp.max(jnp.abs(out16 - ref)))

    print("KERNEL_OK")
</pallas_src>

<mosaic_0001>
module attributes {stable_mosaic.version = 11 : i64} {
  func.func @_fcnet_kernel(%arg0: i32, %arg1: memref<8x16xf32, #tpu.memory_space<vmem>>, %arg2: memref<16x128xf32, #tpu.memory_space<vmem>>, %arg3: memref<1x128xf32, #tpu.memory_space<vmem>>, %arg4: memref<5x128x128xf32, #tpu.memory_space<vmem>>, %arg5: memref<5x1x128xf32, #tpu.memory_space<vmem>>, %arg6: memref<128x8xf32, #tpu.memory_space<vmem>>, %arg7: memref<1x8xf32, #tpu.memory_space<vmem>>, %arg8: memref<8x8xf32, #tpu.memory_space<vmem>>) attributes {dimension_semantics = [#tpu.dimension_semantics<parallel>], iteration_bounds = array<i64: 1>, scalar_prefetch = 0 : i64, scratch_operands = 0 : i64, tpu.core_type = #tpu.core_type<tc>, window_params = [{transform_indices = @transform_0, window_bounds = array<i64: 8, 16>}, {pipeline_mode = #tpu.pipeline_mode<synchronous>, transform_indices = @transform_1, window_bounds = array<i64: 16, 128>}, {pipeline_mode = #tpu.pipeline_mode<synchronous>, transform_indices = @transform_2, window_bounds = array<i64: 1, 128>}, {pipeline_mode = #tpu.pipeline_mode<synchronous>, transform_indices = @transform_3, window_bounds = array<i64: 5, 128, 128>}, {pipeline_mode = #tpu.pipeline_mode<synchronous>, transform_indices = @transform_4, window_bounds = array<i64: 5, 1, 128>}, {pipeline_mode = #tpu.pipeline_mode<synchronous>, transform_indices = @transform_5, window_bounds = array<i64: 128, 8>}, {pipeline_mode = #tpu.pipeline_mode<synchronous>, transform_indices = @transform_6, window_bounds = array<i64: 1, 8>}, {transform_indices = @transform_7, window_bounds = array<i64: 8, 8>}]} {
    %c0 = arith.constant 0 : index
    %c0_0 = arith.constant 0 : index
    %0 = vector.load %arg1[%c0, %c0_0] : memref<8x16xf32, #tpu.memory_space<vmem>>, vector<8x16xf32>
    %c0_1 = arith.constant 0 : index
    %c0_2 = arith.constant 0 : index
    %1 = vector.load %arg2[%c0_1, %c0_2] : memref<16x128xf32, #tpu.memory_space<vmem>>, vector<16x128xf32>
    %cst = arith.constant dense<0.000000e+00> : vector<8x128xf32>
    %2 = tpu.matmul %0, %1, %cst {dimension_numbers = #tpu.dot_dimension_numbers<[1], [0], [0], [1], [0, 0, 1, 1], [], []>} : vector<8x16xf32>, vector<16x128xf32>, vector<8x128xf32> -> vector<8x128xf32>
    %c0_3 = arith.constant 0 : index
    %c0_4 = arith.constant 0 : index
    %3 = vector.load %arg3[%c0_3, %c0_4] : memref<1x128xf32, #tpu.memory_space<vmem>>, vector<1x128xf32>
    %4 = vector.broadcast %3 : vector<1x128xf32> to vector<8x128xf32>
    %5 = arith.addf %2, %4 : vector<8x128xf32>
    %6 = math.tanh %5 : vector<8x128xf32>
    %c0_5 = arith.constant 0 : index
    %c0_6 = arith.constant 0 : index
    %c0_7 = arith.constant 0 : index
    %7 = vector.load %arg4[%c0_5, %c0_6, %c0_7] : memref<5x128x128xf32, #tpu.memory_space<vmem>>, vector<1x128x128xf32>
    %8 = vector.shape_cast %7 : vector<1x128x128xf32> to vector<128x128xf32>
    %cst_8 = arith.constant dense<0.000000e+00> : vector<8x128xf32>
    %9 = tpu.matmul %6, %8, %cst_8 {dimension_numbers = #tpu.dot_dimension_numbers<[1], [0], [0], [1], [0, 0, 1, 1], [], []>} : vector<8x128xf32>, vector<128x128xf32>, vector<8x128xf32> -> vector<8x128xf32>
    %c0_9 = arith.constant 0 : index
    %c0_10 = arith.constant 0 : index
    %c0_11 = arith.constant 0 : index
    %10 = vector.load %arg5[%c0_9, %c0_10, %c0_11] : memref<5x1x128xf32, #tpu.memory_space<vmem>>, vector<1x1x128xf32>
    %11 = vector.shape_cast %10 : vector<1x1x128xf32> to vector<1x128xf32>
    %12 = vector.broadcast %11 : vector<1x128xf32> to vector<8x128xf32>
    %13 = arith.addf %9, %12 : vector<8x128xf32>
    %14 = math.tanh %13 : vector<8x128xf32>
    %c1 = arith.constant 1 : index
    %c0_12 = arith.constant 0 : index
    %c0_13 = arith.constant 0 : index
    %15 = vector.load %arg4[%c1, %c0_12, %c0_13] : memref<5x128x128xf32, #tpu.memory_space<vmem>>, vector<1x128x128xf32>
    %16 = vector.shape_cast %15 : vector<1x128x128xf32> to vector<128x128xf32>
    %cst_14 = arith.constant dense<0.000000e+00> : vector<8x128xf32>
    %17 = tpu.matmul %14, %16, %cst_14 {dimension_numbers = #tpu.dot_dimension_numbers<[1], [0], [0], [1], [0, 0, 1, 1], [], []>} : vector<8x128xf32>, vector<128x128xf32>, vector<8x128xf32> -> vector<8x128xf32>
    %c1_15 = arith.constant 1 : index
    %c0_16 = arith.constant 0 : index
    %c0_17 = arith.constant 0 : index
    %18 = vector.load %arg5[%c1_15, %c0_16, %c0_17] : memref<5x1x128xf32, #tpu.memory_space<vmem>>, vector<1x1x128xf32>
    %19 = vector.shape_cast %18 : vector<1x1x128xf32> to vector<1x128xf32>
    %20 = vector.broadcast %19 : vector<1x128xf32> to vector<8x128xf32>
    %21 = arith.addf %17, %20 : vector<8x128xf32>
    %22 = math.tanh %21 : vector<8x128xf32>
    %c2 = arith.constant 2 : index
    %c0_18 = arith.constant 0 : index
    %c0_19 = arith.constant 0 : index
    %23 = vector.load %arg4[%c2, %c0_18, %c0_19] : memref<5x128x128xf32, #tpu.memory_space<vmem>>, vector<1x128x128xf32>
    %24 = vector.shape_cast %23 : vector<1x128x128xf32> to vector<128x128xf32>
    %cst_20 = arith.constant dense<0.000000e+00> : vector<8x128xf32>
    %25 = tpu.matmul %22, %24, %cst_20 {dimension_numbers = #tpu.dot_dimension_numbers<[1], [0], [0], [1], [0, 0, 1, 1], [], []>} : vector<8x128xf32>, vector<128x128xf32>, vector<8x128xf32> -> vector<8x128xf32>
    %c2_21 = arith.constant 2 : index
    %c0_22 = arith.constant 0 : index
    %c0_23 = arith.constant 0 : index
    %26 = vector.load %arg5[%c2_21, %c0_22, %c0_23] : memref<5x1x128xf32, #tpu.memory_space<vmem>>, vector<1x1x128xf32>
    %27 = vector.shape_cast %26 : vector<1x1x128xf32> to vector<1x128xf32>
    %28 = vector.broadcast %27 : vector<1x128xf32> to vector<8x128xf32>
    %29 = arith.addf %25, %28 : vector<8x128xf32>
    %30 = math.tanh %29 : vector<8x128xf32>
    %c3 = arith.constant 3 : index
    %c0_24 = arith.constant 0 : index
    %c0_25 = arith.constant 0 : index
    %31 = vector.load %arg4[%c3, %c0_24, %c0_25] : memref<5x128x128xf32, #tpu.memory_space<vmem>>, vector<1x128x128xf32>
    %32 = vector.shape_cast %31 : vector<1x128x128xf32> to vector<128x128xf32>
    %cst_26 = arith.constant dense<0.000000e+00> : vector<8x128xf32>
    %33 = tpu.matmul %30, %32, %cst_26 {dimension_numbers = #tpu.dot_dimension_numbers<[1], [0], [0], [1], [0, 0, 1, 1], [], []>} : vector<8x128xf32>, vector<128x128xf32>, vector<8x128xf32> -> vector<8x128xf32>
    %c3_27 = arith.constant 3 : index
    %c0_28 = arith.constant 0 : index
    %c0_29 = arith.constant 0 : index
    %34 = vector.load %arg5[%c3_27, %c0_28, %c0_29] : memref<5x1x128xf32, #tpu.memory_space<vmem>>, vector<1x1x128xf32>
    %35 = vector.shape_cast %34 : vector<1x1x128xf32> to vector<1x128xf32>
    %36 = vector.broadcast %35 : vector<1x128xf32> to vector<8x128xf32>
    %37 = arith.addf %33, %36 : vector<8x128xf32>
    %38 = math.tanh %37 : vector<8x128xf32>
    %c4 = arith.constant 4 : index
    %c0_30 = arith.constant 0 : index
    %c0_31 = arith.constant 0 : index
    %39 = vector.load %arg4[%c4, %c0_30, %c0_31] : memref<5x128x128xf32, #tpu.memory_space<vmem>>, vector<1x128x128xf32>
    %40 = vector.shape_cast %39 : vector<1x128x128xf32> to vector<128x128xf32>
    %cst_32 = arith.constant dense<0.000000e+00> : vector<8x128xf32>
    %41 = tpu.matmul %38, %40, %cst_32 {dimension_numbers = #tpu.dot_dimension_numbers<[1], [0], [0], [1], [0, 0, 1, 1], [], []>} : vector<8x128xf32>, vector<128x128xf32>, vector<8x128xf32> -> vector<8x128xf32>
    %c4_33 = arith.constant 4 : index
    %c0_34 = arith.constant 0 : index
    %c0_35 = arith.constant 0 : index
    %42 = vector.load %arg5[%c4_33, %c0_34, %c0_35] : memref<5x1x128xf32, #tpu.memory_space<vmem>>, vector<1x1x128xf32>
    %43 = vector.shape_cast %42 : vector<1x1x128xf32> to vector<1x128xf32>
    %44 = vector.broadcast %43 : vector<1x128xf32> to vector<8x128xf32>
    %45 = arith.addf %41, %44 : vector<8x128xf32>
    %46 = math.tanh %45 : vector<8x128xf32>
    %c0_36 = arith.constant 0 : index
    %c0_37 = arith.constant 0 : index
    %47 = vector.load %arg6[%c0_36, %c0_37] : memref<128x8xf32, #tpu.memory_space<vmem>>, vector<128x8xf32>
    %cst_38 = arith.constant dense<0.000000e+00> : vector<8x8xf32>
    %48 = tpu.matmul %46, %47, %cst_38 {dimension_numbers = #tpu.dot_dimension_numbers<[1], [0], [0], [1], [0, 0, 1, 1], [], []>} : vector<8x128xf32>, vector<128x8xf32>, vector<8x8xf32> -> vector<8x8xf32>
    %c0_39 = arith.constant 0 : index
    %c0_40 = arith.constant 0 : index
    %49 = vector.load %arg7[%c0_39, %c0_40] : memref<1x8xf32, #tpu.memory_space<vmem>>, vector<1x8xf32>
    %50 = vector.broadcast %49 : vector<1x8xf32> to vector<8x8xf32>
    %51 = arith.addf %48, %50 : vector<8x8xf32>
    %c0_41 = arith.constant 0 : index
    %c0_42 = arith.constant 0 : index
    %52 = vector.load %arg8[%c0_41, %c0_42] : memref<8x8xf32, #tpu.memory_space<vmem>>, vector<8x8xf32>
    tpu.vector_store %arg8[%c0_41, %c0_42], %51 {strides = array<i32>} : memref<8x8xf32, #tpu.memory_space<vmem>>, vector<8x8xf32>,
    return
  }
  func.func @transform_0(%arg0: i32) -> (i32, i32) {
    %c0_i32 = arith.constant 0 : i32
    %c0_i32_0 = arith.constant 0 : i32
    return %arg0, %c0_i32 : i32, i32
  }
  func.func @transform_1(%arg0: i32) -> (i32, i32) {
    %c0_i32 = arith.constant 0 : i32
    %c0_i32_0 = arith.constant 0 : i32
    %c0_i32_1 = arith.constant 0 : i32
    return %c0_i32, %c0_i32_0 : i32, i32
  }
  func.func @transform_2(%arg0: i32) -> (i32, i32) {
    %c0_i32 = arith.constant 0 : i32
    %c0_i32_0 = arith.constant 0 : i32
    %c0_i32_1 = arith.constant 0 : i32
    return %c0_i32, %c0_i32_0 : i32, i32
  }
  func.func @transform_3(%arg0: i32) -> (i32, i32, i32) {
    %c0_i32 = arith.constant 0 : i32
    %c0_i32_0 = arith.constant 0 : i32
    %c0_i32_1 = arith.constant 0 : i32
    %c0_i32_2 = arith.constant 0 : i32
    return %c0_i32, %c0_i32_0, %c0_i32_1 : i32, i32, i32
  }
  func.func @transform_4(%arg0: i32) -> (i32, i32, i32) {
    %c0_i32 = arith.constant 0 : i32
    %c0_i32_0 = arith.constant 0 : i32
    %c0_i32_1 = arith.constant 0 : i32
    %c0_i32_2 = arith.constant 0 : i32
    return %c0_i32, %c0_i32_0, %c0_i32_1 : i32, i32, i32
  }
  func.func @transform_5(%arg0: i32) -> (i32, i32) {
    %c0_i32 = arith.constant 0 : i32
    %c0_i32_0 = arith.constant 0 : i32
    %c0_i32_1 = arith.constant 0 : i32
    return %c0_i32, %c0_i32_0 : i32, i32
  }
  func.func @transform_6(%arg0: i32) -> (i32, i32) {
    %c0_i32 = arith.constant 0 : i32
    %c0_i32_0 = arith.constant 0 : i32
    %c0_i32_1 = arith.constant 0 : i32
    return %c0_i32, %c0_i32_0 : i32, i32
  }
  func.func @transform_7(%arg0: i32) -> (i32, i32) {
    %c0_i32 = arith.constant 0 : i32
    %c0_i32_0 = arith.constant 0 : i32
    return %arg0, %c0_i32 : i32, i32
  }
}

</mosaic_0001>

<llo_original>
// kernel: tpu_custom_call.1
$region0: #{tpu_custom_call.1}
  #allocation0 [shape = 'u32[]', space=smem, size = 0x4, offset = 0x4, fixed_abs, tag = 'smem constant byte address 0x4 - core index']
  #allocation1 [shape = 'u32[144,128]{1,0:T(1,128)}', space=vmem, size = 0x12000, scoped, tag = 'internal scratch']
  %s0 = inlined_call_operand.vmem [shape: f32[8,16], index: 0, kind: input, shape index: {}]
  %s1 = inlined_call_operand.vmem [shape: f32[16,128], index: 1, kind: input, shape index: {}]
  %s2 = inlined_call_operand.vmem [shape: f32[1,128], index: 2, kind: input, shape index: {}]
  %s3 = inlined_call_operand.hbm [shape: f32[5,128,128], index: 3, kind: input, shape index: {}]
  %s4 = inlined_call_operand.vmem [shape: f32[5,1,128], index: 4, kind: input, shape index: {}]
  %s5 = inlined_call_operand.vmem [shape: f32[128,8], index: 5, kind: input, shape index: {}]
  %s6 = inlined_call_operand.vmem [shape: f32[1,8], index: 6, kind: input, shape index: {}]
  %s7 = inlined_call_operand.hbm [shape: f32[8,8], index: 7, kind: output, shape index: {}]
  %s8 = sld [smem:[#allocation0]]
  $region42: #{tpu_custom_call.1} parent=0
    _
  %s10 = ssub.s32 1, %s8
  %s11 = scalar_select 0, %s10, %s8
  $region1: #{tpu_custom_call.1} parent=0
    #allocation2 [shape = 'u8[327680]{0}', space=vmem, size = 0x50000, scoped, tag = 'input window, operand 3, single buffered']
    #allocation3 [shape = 's32[1]{0}', space=sflag, size = 0x4, scoped, tag = 'scoped memory for tpu_custom_call.1']
    #allocation4 [shape = 's32[1]{0}', space=sflag, size = 0x4, scoped, tag = 'scoped memory for tpu_custom_call.1']
    #allocation5 [shape = 'u8[4096]{0}', space=vmem, size = 0x1000, scoped, tag = 'output window, operand 0, single buffered']
    %12 = vsyncpa [#allocation3], 0
    %13 = vsyncpa [#allocation4], 0
    // Predicated region
    $region2: #{tpu_custom_call.1} parent=1 // pred_check
      _
    $region3: #{tpu_custom_call.1} parent=1 // pred_check_branch
      %15 = sbr.rel (0) target = $region5
    $region4: #{tpu_custom_call.1} parent=1 // pred_region
      _
    $region5: #{tpu_custom_call.1} parent=1 // pred_fallthru
      _
    // Predicated region
    $region6: #{tpu_custom_call.1} parent=1 // pred_check
      _
    $region7: #{tpu_custom_call.1} parent=1 // pred_check_branch
      %17 = sbr.rel (0) target = $region9
    $region8: #{tpu_custom_call.1} parent=1 // pred_region
      _
    $region9: #{tpu_custom_call.1} parent=1 // pred_fallthru
      _
    // Predicated region
    $region10: #{tpu_custom_call.1} parent=1 // pred_check
      _
    $region11: #{tpu_custom_call.1} parent=1 // pred_check_branch
      %19 = sbr.rel (0) target = $region13
    $region12: #{tpu_custom_call.1} parent=1 // pred_region
      _
    $region13: #{tpu_custom_call.1} parent=1 // pred_fallthru
      _
    // Predicated region
    $region14: #{tpu_custom_call.1} parent=1 // pred_check
      _
    $region15: #{tpu_custom_call.1} parent=1 // pred_check_branch
      %21 = sbr.rel (0) target = $region17
    $region16: #{tpu_custom_call.1} parent=1 // pred_region
      %s23 = ssub.s32 10240, 10240
      %24 = vsyncadd [#allocation3], %s23
      %s25 = sshll.u32 [#allocation2], 4
      %s26 = int_to_ptr.vmem [resolvable:$true] %s25
      %31 = dma.hbm_to_vmem [thread:$0]  %s3, 10240, %s26, [#allocation3], 128, 128, 8
    $region17: #{tpu_custom_call.1} parent=1 // pred_fallthru
      _
    // Predicated region
    $region18: #{tpu_custom_call.1} parent=1 // pred_check
      _
    $region19: #{tpu_custom_call.1} parent=1 // pred_check_branch
      %33 = sbr.rel (0) target = $region21
    $region20: #{tpu_custom_call.1} parent=1 // pred_region
      _
    $region21: #{tpu_custom_call.1} parent=1 // pred_fallthru
      _
    // Predicated region
    $region22: #{tpu_custom_call.1} parent=1 // pred_check
      _
    $region23: #{tpu_custom_call.1} parent=1 // pred_check_branch
      %35 = sbr.rel (0) target = $region25
    $region24: #{tpu_custom_call.1} parent=1 // pred_region
      _
    $region25: #{tpu_custom_call.1} parent=1 // pred_fallthru
      _
    // Predicated region
    $region26: #{tpu_custom_call.1} parent=1 // pred_check
      _
    $region27: #{tpu_custom_call.1} parent=1 // pred_check_branch
      %37 = sbr.rel (0) target = $region29
    $region28: #{tpu_custom_call.1} parent=1 // pred_region
      _
    $region29: #{tpu_custom_call.1} parent=1 // pred_fallthru
      _
    // Predicated region
    $region30: #{tpu_custom_call.1} parent=1 // pred_check
      _
    $region31: #{tpu_custom_call.1} parent=1 // pred_check_branch
      %39 = sbr.rel (0) target = $region33
    $region32: #{tpu_custom_call.1} parent=1 // pred_region
      %40 = dma.done [#allocation3], 10240
    $region33: #{tpu_custom_call.1} parent=1 // pred_fallthru
      _
    %v41 = vld [vmem:[%s0] sm:$0xff]
    %v42 = vld [vmem:[%s1] sm:$0xff]
    %v43 = vld [vmem:[%s1 + $0x8] sm:$0xff]
    %v44 = vld [vmem:[%s2] sm:$0x1]
    %v46 = vlaneseq
    %v47 = vshrl.u32 %v46, 7
    %v48 = vsub.s32 0, %v47
    %v49 = vrot.slane %v44, %v48
    %vm51 = vcmask 130048
    %v53 = vsel %vm51, %v41, 0
    %55 = vmatprep.subr.mxu0 0.0
    %56 = vmatpush1.msra.mxu0 %v42
    %57 = vmatprep.subr.mxu0 0.0
    %58 = vmatpush1.msra.mxu0 %v43
    %59 = vmatprep.subr.mxu0 0.0
    %60 = vmatpush1.msra.mxu0 0.0
    %61 = vmatprep.subr.mxu0 0.0
    %62 = vmatpush1.msra.mxu0 0.0
    %63 = vmatprep.subr.mxu0 0.0
    %64 = vmatpush1.msra.mxu0 0.0
    %65 = vmatprep.subr.mxu0 0.0
    %66 = vmatpush1.msra.mxu0 0.0
    %67 = vmatprep.subr.mxu0 0.0
    %68 = vmatpush1.msra.mxu0 0.0
    %69 = vmatprep.subr.mxu0 0.0
    %70 = vmatpush1.msra.mxu0 0.0
    %71 = vmatprep.subr.mxu0 0.0
    %72 = vmatpush1.msra.mxu0 0.0
    %73 = vmatprep.subr.mxu0 0.0
    %74 = vmatpush1.msra.mxu0 0.0
    %75 = vmatprep.subr.mxu0 0.0
    %76 = vmatpush1.msra.mxu0 0.0
    %77 = vmatprep.subr.mxu0 0.0
    %78 = vmatpush1.msra.mxu0 0.0
    %79 = vmatprep.subr.mxu0 0.0
    %80 = vmatpush1.msra.mxu0 0.0
    %81 = vmatprep.subr.mxu0 0.0
    %82 = vmatpush1.msra.mxu0 0.0
    %83 = vmatprep.subr.mxu0 0.0
    %84 = vmatpush1.msra.mxu0 0.0
    %85 = vmatprep.subr.mxu0 0.0
    %86 = vmatpush1.msra.mxu0 0.0
    %87 = vmatprep.subr.mxu0 0.0
    %88 = vmatpush1.msra.mxu0 0.0
    %89 = vmatprep.subr.mxu0 0.0
    %90 = vmatpush1.msra.mxu0 0.0
    %91 = vmatprep.subr.mxu0 0.0
    %92 = vmatpush1.msra.mxu0 0.0
    %93 = vmatprep.subr.mxu0 0.0
    %94 = vmatpush1.msra.mxu0 0.0
    %95 = vmatprep.subr.mxu0 0.0
    %96 = vmatpush1.msra.mxu0 0.0
    %97 = vmatprep.subr.mxu0 0.0
    %98 = vmatpush1.msra.mxu0 0.0
    %99 = vmatprep.subr.mxu0 0.0
    %100 = vmatpush1.msra.mxu0 0.0
    %101 = vmatprep.subr.mxu0 0.0
    %102 = vmatpush1.msra.mxu0 0.0
    %103 = vmatprep.subr.mxu0 0.0
    %104 = vmatpush1.msra.mxu0 0.0
    %105 = vmatprep.subr.mxu0 0.0
    %106 = vmatpush1.msra.mxu0 0.0
    %107 = vmatprep.subr.mxu0 0.0
    %108 = vmatpush1.msra.mxu0 0.0
    %109 = vmatprep.subr.mxu0 0.0
    %110 = vmatpush1.msra.mxu0 0.0
    %111 = vmatprep.subr.mxu0 0.0
    %112 = vmatpush1.msra.mxu0 0.0
    %113 = vmatprep.subr.mxu0 0.0
    %114 = vmatpush1.msra.mxu0 0.0
    %115 = vmatprep.subr.mxu0 0.0
    %116 = vmatpush1.msra.mxu0 0.0
    %117 = vmatprep.subr.mxu0 0.0
    %118 = vmatpush1.msra.mxu0 0.0
    %119 = vmatprep.mubr.f32.mxu0 0.0
    %120 = vmatmul.mubr.f32.gmra.mrb[0].mxu0 %v53
    %v121 = vpop.f32.mrb[0].mxu0
    %v122 = vadd.f32 %v49, %v121
    %v123 = vpop.f32.mrb[0].mxu0
    %124 = vdwg.mxu0
    %v125 = vtanh.pop %v122
    %v126 = vld [vmem:[#allocation2] sm:$0xff]
    %v127 = vld [vmem:[#allocation2 + $0x8] sm:$0xff]
    %v128 = vld [vmem:[#allocation2 + $0x10] sm:$0xff]
    %v129 = vld [vmem:[#allocation2 + $0x18] sm:$0xff]
    %v130 = vld [vmem:[#allocation2 + $0x20] sm:$0xff]
    %v131 = vld [vmem:[#allocation2 + $0x28] sm:$0xff]
    %v132 = vld [vmem:[#allocation2 + $0x30] sm:$0xff]
    %v133 = vld [vmem:[#allocation2 + $0x38] sm:$0xff]
    %v134 = vld [vmem:[#allocation2 + $0x40] sm:$0xff]
    %v135 = vld [vmem:[#allocation2 + $0x48] sm:$0xff]
    %v136 = vld [vmem:[#allocation2 + $0x50] sm:$0xff]
    %v137 = vld [vmem:[#allocation2 + $0x58] sm:$0xff]
    %v138 = vld [vmem:[#allocation2 + $0x60] sm:$0xff]
    %v139 = vld [vmem:[#allocation2 + $0x68] sm:$0xff]
    %v140 = vld [vmem:[#allocation2 + $0x70] sm:$0xff]
    %v141 = vld [vmem:[#allocation2 + $0x78] sm:$0xff]
    %v142 = vld [vmem:[%s4] sm:$0x1]
    %v144 = vlaneseq
    %v145 = vshrl.u32 %v144, 7
    %v146 = vsub.s32 0, %v145
    %v147 = vrot.slane %v142, %v146
    %149 = vmatprep.subr.mxu0 0.0
    %150 = vmatpush1.msra.mxu0 %v126
    %151 = vmatprep.subr.mxu0 0.0
    %152 = vmatpush1.msra.mxu0 %v127
    %153 = vmatprep.subr.mxu0 0.0
    %154 = vmatpush1.msra.mxu0 %v128
    %155 = vmatprep.subr.mxu0 0.0
    %156 = vmatpush1.msra.mxu0 %v129
    %157 = vmatprep.subr.mxu0 0.0
    %158 = vmatpush1.msra.mxu0 %v130
    %159 = vmatprep.subr.mxu0 0.0
    %160 = vmatpush1.msra.mxu0 %v131
    %161 = vmatprep.subr.mxu0 0.0
    %162 = vmatpush1.msra.mxu0 %v132
    %163 = vmatprep.subr.mxu0 0.0
    %164 = vmatpush1.msra.mxu0 %v133
    %165 = vmatprep.subr.mxu0 0.0
    %166 = vmatpush1.msra.mxu0 %v134
    %167 = vmatprep.subr.mxu0 0.0
    %168 = vmatpush1.msra.mxu0 %v135
    %169 = vmatprep.subr.mxu0 0.0
    %170 = vmatpush1.msra.mxu0 %v136
    %171 = vmatprep.subr.mxu0 0.0
    %172 = vmatpush1.msra.mxu0 %v137
    %173 = vmatprep.subr.mxu0 0.0
    %174 = vmatpush1.msra.mxu0 %v138
    %175 = vmatprep.subr.mxu0 0.0
    %176 = vmatpush1.msra.mxu0 %v139
    %177 = vmatprep.subr.mxu0 0.0
    %178 = vmatpush1.msra.mxu0 %v140
    %179 = vmatprep.subr.mxu0 0.0
    %180 = vmatpush1.msra.mxu0 %v141
    %181 = vmatprep.subr.mxu0 0.0
    %182 = vmatpush1.msra.mxu0 0.0
    %183 = vmatprep.subr.mxu0 0.0
    %184 = vmatpush1.msra.mxu0 0.0
    %185 = vmatprep.subr.mxu0 0.0
    %186 = vmatpush1.msra.mxu0 0.0
    %187 = vmatprep.subr.mxu0 0.0
    %188 = vmatpush1.msra.mxu0 0.0
    %189 = vmatprep.subr.mxu0 0.0
    %190 = vmatpush1.msra.mxu0 0.0
    %191 = vmatprep.subr.mxu0 0.0
    %192 = vmatpush1.msra.mxu0 0.0
    %193 = vmatprep.subr.mxu0 0.0
    %194 = vmatpush1.msra.mxu0 0.0
    %195 = vmatprep.subr.mxu0 0.0
    %196 = vmatpush1.msra.mxu0 0.0
    %197 = vmatprep.subr.mxu0 0.0
    %198 = vmatpush1.msra.mxu0 0.0
    %199 = vmatprep.subr.mxu0 0.0
    %200 = vmatpush1.msra.mxu0 0.0
    %201 = vmatprep.subr.mxu0 0.0
    %202 = vmatpush1.msra.mxu0 0.0
    %203 = vmatprep.subr.mxu0 0.0
    %204 = vmatpush1.msra.mxu0 0.0
    %205 = vmatprep.subr.mxu0 0.0
    %206 = vmatpush1.msra.mxu0 0.0
    %207 = vmatprep.subr.mxu0 0.0
    %208 = vmatpush1.msra.mxu0 0.0
    %209 = vmatprep.subr.mxu0 0.0
    %210 = vmatpush1.msra.mxu0 0.0
    %211 = vmatprep.subr.mxu0 0.0
    %212 = vmatpush1.msra.mxu0 0.0
    %213 = vmatprep.mubr.f32.mxu0 0.0
    %214 = vmatmul.mubr.f32.gmra.mrb[0].mxu0 %v125
    %v215 = vpop.f32.mrb[0].mxu0
    %v216 = vadd.f32 %v147, %v215
    %v217 = vpop.f32.mrb[0].mxu0
    %218 = vdwg.mxu0
    %v219 = vtanh.pop %v216
    %s220 = scalar_lea.vmem [#allocation2], 128
    %v221 = vld [vmem:[%s220] sm:$0xff]
    %v222 = vld [vmem:[%s220 + $0x8] sm:$0xff]
    %v223 = vld [vmem:[%s220 + $0x10] sm:$0xff]
    %v224 = vld [vmem:[%s220 + $0x18] sm:$0xff]
    %v225 = vld [vmem:[%s220 + $0x20] sm:$0xff]
    %v226 = vld [vmem:[%s220 + $0x28] sm:$0xff]
    %v227 = vld [vmem:[%s220 + $0x30] sm:$0xff]
    %v228 = vld [vmem:[%s220 + $0x38] sm:$0xff]
    %v229 = vld [vmem:[%s220 + $0x40] sm:$0xff]
    %v230 = vld [vmem:[%s220 + $0x48] sm:$0xff]
    %v231 = vld [vmem:[%s220 + $0x50] sm:$0xff]
    %v232 = vld [vmem:[%s220 + $0x58] sm:$0xff]
    %v233 = vld [vmem:[%s220 + $0x60] sm:$0xff]
    %v234 = vld [vmem:[%s220 + $0x68] sm:$0xff]
    %v235 = vld [vmem:[%s220 + $0x70] sm:$0xff]
    %v236 = vld [vmem:[%s220 + $0x78] sm:$0xff]
    %s237 = scalar_lea.vmem %s4, 1
    %v238 = vld [vmem:[%s237] sm:$0x1]
    %v240 = vlaneseq
    %v241 = vshrl.u32 %v240, 7
    %v242 = vsub.s32 0, %v241
    %v243 = vrot.slane %v238, %v242
    %245 = vmatprep.subr.mxu0 0.0
    %246 = vmatpush1.msra.mxu0 %v221
    %247 = vmatprep.subr.mxu0 0.0
    %248 = vmatpush1.msra.mxu0 %v222
    %249 = vmatprep.subr.mxu0 0.0
    %250 = vmatpush1.msra.mxu0 %v223
    %251 = vmatprep.subr.mxu0 0.0
    %252 = vmatpush1.msra.mxu0 %v224
    %253 = vmatprep.subr.mxu0 0.0
    %254 = vmatpush1.msra.mxu0 %v225
    %255 = vmatprep.subr.mxu0 0.0
    %256 = vmatpush1.msra.mxu0 %v226
    %257 = vmatprep.subr.mxu0 0.0
    %258 = vmatpush1.msra.mxu0 %v227
    %259 = vmatprep.subr.mxu0 0.0
    %260 = vmatpush1.msra.mxu0 %v228
    %261 = vmatprep.subr.mxu0 0.0
    %262 = vmatpush1.msra.mxu0 %v229
    %263 = vmatprep.subr.mxu0 0.0
    %264 = vmatpush1.msra.mxu0 %v230
    %265 = vmatprep.subr.mxu0 0.0
    %266 = vmatpush1.msra.mxu0 %v231
    %267 = vmatprep.subr.mxu0 0.0
    %268 = vmatpush1.msra.mxu0 %v232
    %269 = vmatprep.subr.mxu0 0.0
    %270 = vmatpush1.msra.mxu0 %v233
    %271 = vmatprep.subr.mxu0 0.0
    %272 = vmatpush1.msra.mxu0 %v234
    %273 = vmatprep.subr.mxu0 0.0
    %274 = vmatpush1.msra.mxu0 %v235
    %275 = vmatprep.subr.mxu0 0.0
    %276 = vmatpush1.msra.mxu0 %v236
    %277 = vmatprep.subr.mxu0 0.0
    %278 = vmatpush1.msra.mxu0 0.0
    %279 = vmatprep.subr.mxu0 0.0
    %280 = vmatpush1.msra.mxu0 0.0
    %281 = vmatprep.subr.mxu0 0.0
    %282 = vmatpush1.msra.mxu0 0.0
    %283 = vmatprep.subr.mxu0 0.0
    %284 = vmatpush1.msra.mxu0 0.0
    %285 = vmatprep.subr.mxu0 0.0
    %286 = vmatpush1.msra.mxu0 0.0
    %287 = vmatprep.subr.mxu0 0.0
    %288 = vmatpush1.msra.mxu0 0.0
    %289 = vmatprep.subr.mxu0 0.0
    %290 = vmatpush1.msra.mxu0 0.0
    %291 = vmatprep.subr.mxu0 0.0
    %292 = vmatpush1.msra.mxu0 0.0
    %293 = vmatprep.subr.mxu0 0.0
    %294 = vmatpush1.msra.mxu0 0.0
    %295 = vmatprep.subr.mxu0 0.0
    %296 = vmatpush1.msra.mxu0 0.0
    %297 = vmatprep.subr.mxu0 0.0
    %298 = vmatpush1.msra.mxu0 0.0
    %299 = vmatprep.subr.mxu0 0.0
    %300 = vmatpush1.msra.mxu0 0.0
    %301 = vmatprep.subr.mxu0 0.0
    %302 = vmatpush1.msra.mxu0 0.0
    %303 = vmatprep.subr.mxu0 0.0
    %304 = vmatpush1.msra.mxu0 0.0
    %305 = vmatprep.subr.mxu0 0.0
    %306 = vmatpush1.msra.mxu0 0.0
    %307 = vmatprep.subr.mxu0 0.0
    %308 = vmatpush1.msra.mxu0 0.0
    %309 = vmatprep.mubr.f32.mxu0 0.0
    %310 = vmatmul.mubr.f32.gmra.mrb[0].mxu0 %v219
    %v311 = vpop.f32.mrb[0].mxu0
    %v312 = vadd.f32 %v243, %v311
    %v313 = vpop.f32.mrb[0].mxu0
    %314 = vdwg.mxu0
    %v315 = vtanh.pop %v312
    %s316 = scalar_lea.vmem [#allocation2], 256
    %v317 = vld [vmem:[%s316] sm:$0xff]
    %v318 = vld [vmem:[%s316 + $0x8] sm:$0xff]
    %v319 = vld [vmem:[%s316 + $0x10] sm:$0xff]
    %v320 = vld [vmem:[%s316 + $0x18] sm:$0xff]
    %v321 = vld [vmem:[%s316 + $0x20] sm:$0xff]
    %v322 = vld [vmem:[%s316 + $0x28] sm:$0xff]
    %v323 = vld [vmem:[%s316 + $0x30] sm:$0xff]
    %v324 = vld [vmem:[%s316 + $0x38] sm:$0xff]
    %v325 = vld [vmem:[%s316 + $0x40] sm:$0xff]
    %v326 = vld [vmem:[%s316 + $0x48] sm:$0xff]
    %v327 = vld [vmem:[%s316 + $0x50] sm:$0xff]
    %v328 = vld [vmem:[%s316 + $0x58] sm:$0xff]
    %v329 = vld [vmem:[%s316 + $0x60] sm:$0xff]
    %v330 = vld [vmem:[%s316 + $0x68] sm:$0xff]
    %v331 = vld [vmem:[%s316 + $0x70] sm:$0xff]
    %v332 = vld [vmem:[%s316 + $0x78] sm:$0xff]
    %s333 = scalar_lea.vmem %s4, 2
    %v334 = vld [vmem:[%s333] sm:$0x1]
    %v336 = vlaneseq
    %v337 = vshrl.u32 %v336, 7
    %v338 = vsub.s32 0, %v337
    %v339 = vrot.slane %v334, %v338
    %341 = vmatprep.subr.mxu0 0.0
    %342 = vmatpush1.msra.mxu0 %v317
    %343 = vmatprep.subr.mxu0 0.0
    %344 = vmatpush1.msra.mxu0 %v318
    %345 = vmatprep.subr.mxu0 0.0
    %346 = vmatpush1.msra.mxu0 %v319
    %347 = vmatprep.subr.mxu0 0.0
    %348 = vmatpush1.msra.mxu0 %v320
    %349 = vmatprep.subr.mxu0 0.0
    %350 = vmatpush1.msra.mxu0 %v321
    %351 = vmatprep.subr.mxu0 0.0
    %352 = vmatpush1.msra.mxu0 %v322
    %353 = vmatprep.subr.mxu0 0.0
    %354 = vmatpush1.msra.mxu0 %v323
    %355 = vmatprep.subr.mxu0 0.0
    %356 = vmatpush1.msra.mxu0 %v324
    %357 = vmatprep.subr.mxu0 0.0
    %358 = vmatpush1.msra.mxu0 %v325
    %359 = vmatprep.subr.mxu0 0.0
    %360 = vmatpush1.msra.mxu0 %v326
    %361 = vmatprep.subr.mxu0 0.0
    %362 = vmatpush1.msra.mxu0 %v327
    %363 = vmatprep.subr.mxu0 0.0
    %364 = vmatpush1.msra.mxu0 %v328
    %365 = vmatprep.subr.mxu0 0.0
    %366 = vmatpush1.msra.mxu0 %v329
    %367 = vmatprep.subr.mxu0 0.0
    %368 = vmatpush1.msra.mxu0 %v330
    %369 = vmatprep.subr.mxu0 0.0
    %370 = vmatpush1.msra.mxu0 %v331
    %371 = vmatprep.subr.mxu0 0.0
    %372 = vmatpush1.msra.mxu0 %v332
    %373 = vmatprep.subr.mxu0 0.0
    %374 = vmatpush1.msra.mxu0 0.0
    %375 = vmatprep.subr.mxu0 0.0
    %376 = vmatpush1.msra.mxu0 0.0
    %377 = vmatprep.subr.mxu0 0.0
    %378 = vmatpush1.msra.mxu0 0.0
    %379 = vmatprep.subr.mxu0 0.0
    %380 = vmatpush1.msra.mxu0 0.0
    %381 = vmatprep.subr.mxu0 0.0
    %382 = vmatpush1.msra.mxu0 0.0
    %383 = vmatprep.subr.mxu0 0.0
    %384 = vmatpush1.msra.mxu0 0.0
    %385 = vmatprep.subr.mxu0 0.0
    %386 = vmatpush1.msra.mxu0 0.0
    %387 = vmatprep.subr.mxu0 0.0
    %388 = vmatpush1.msra.mxu0 0.0
    %389 = vmatprep.subr.mxu0 0.0
    %390 = vmatpush1.msra.mxu0 0.0
    %391 = vmatprep.subr.mxu0 0.0
    %392 = vmatpush1.msra.mxu0 0.0
    %393 = vmatprep.subr.mxu0 0.0
    %394 = vmatpush1.msra.mxu0 0.0
    %395 = vmatprep.subr.mxu0 0.0
    %396 = vmatpush1.msra.mxu0 0.0
    %397 = vmatprep.subr.mxu0 0.0
    %398 = vmatpush1.msra.mxu0 0.0
    %399 = vmatprep.subr.mxu0 0.0
    %400 = vmatpush1.msra.mxu0 0.0
    %401 = vmatprep.subr.mxu0 0.0
    %402 = vmatpush1.msra.mxu0 0.0
    %403 = vmatprep.subr.mxu0 0.0
    %404 = vmatpush1.msra.mxu0 0.0
    %405 = vmatprep.mubr.f32.mxu0 0.0
    %406 = vmatmul.mubr.f32.gmra.mrb[0].mxu0 %v315
    %v407 = vpop.f32.mrb[0].mxu0
    %v408 = vadd.f32 %v339, %v407
    %v409 = vpop.f32.mrb[0].mxu0
    %410 = vdwg.mxu0
    %v411 = vtanh.pop %v408
    %s412 = scalar_lea.vmem [#allocation2], 384
    %v413 = vld [vmem:[%s412] sm:$0xff]
    %v414 = vld [vmem:[%s412 + $0x8] sm:$0xff]
    %v415 = vld [vmem:[%s412 + $0x10] sm:$0xff]
    %v416 = vld [vmem:[%s412 + $0x18] sm:$0xff]
    %v417 = vld [vmem:[%s412 + $0x20] sm:$0xff]
    %v418 = vld [vmem:[%s412 + $0x28] sm:$0xff]
    %v419 = vld [vmem:[%s412 + $0x30] sm:$0xff]
    %v420 = vld [vmem:[%s412 + $0x38] sm:$0xff]
    %v421 = vld [vmem:[%s412 + $0x40] sm:$0xff]
    %v422 = vld [vmem:[%s412 + $0x48] sm:$0xff]
    %v423 = vld [vmem:[%s412 + $0x50] sm:$0xff]
    %v424 = vld [vmem:[%s412 + $0x58] sm:$0xff]
    %v425 = vld [vmem:[%s412 + $0x60] sm:$0xff]
    %v426 = vld [vmem:[%s412 + $0x68] sm:$0xff]
    %v427 = vld [vmem:[%s412 + $0x70] sm:$0xff]
    %v428 = vld [vmem:[%s412 + $0x78] sm:$0xff]
    %s429 = scalar_lea.vmem %s4, 3
    %v430 = vld [vmem:[%s429] sm:$0x1]
    %v432 = vlaneseq
    %v433 = vshrl.u32 %v432, 7
    %v434 = vsub.s32 0, %v433
    %v435 = vrot.slane %v430, %v434
    %437 = vmatprep.subr.mxu0 0.0
    %438 = vmatpush1.msra.mxu0 %v413
    %439 = vmatprep.subr.mxu0 0.0
    %440 = vmatpush1.msra.mxu0 %v414
    %441 = vmatprep.subr.mxu0 0.0
    %442 = vmatpush1.msra.mxu0 %v415
    %443 = vmatprep.subr.mxu0 0.0
    %444 = vmatpush1.msra.mxu0 %v416
    %445 = vmatprep.subr.mxu0 0.0
    %446 = vmatpush1.msra.mxu0 %v417
    %447 = vmatprep.subr.mxu0 0.0
    %448 = vmatpush1.msra.mxu0 %v418
    %449 = vmatprep.subr.mxu0 0.0
    %450 = vmatpush1.msra.mxu0 %v419
    %451 = vmatprep.subr.mxu0 0.0
    %452 = vmatpush1.msra.mxu0 %v420
    %453 = vmatprep.subr.mxu0 0.0
    %454 = vmatpush1.msra.mxu0 %v421
    %455 = vmatprep.subr.mxu0 0.0
    %456 = vmatpush1.msra.mxu0 %v422
    %457 = vmatprep.subr.mxu0 0.0
    %458 = vmatpush1.msra.mxu0 %v423
    %459 = vmatprep.subr.mxu0 0.0
    %460 = vmatpush1.msra.mxu0 %v424
    %461 = vmatprep.subr.mxu0 0.0
    %462 = vmatpush1.msra.mxu0 %v425
    %463 = vmatprep.subr.mxu0 0.0
    %464 = vmatpush1.msra.mxu0 %v426
    %465 = vmatprep.subr.mxu0 0.0
    %466 = vmatpush1.msra.mxu0 %v427
    %467 = vmatprep.subr.mxu0 0.0
    %468 = vmatpush1.msra.mxu0 %v428
    %469 = vmatprep.subr.mxu0 0.0
    %470 = vmatpush1.msra.mxu0 0.0
    %471 = vmatprep.subr.mxu0 0.0
    %472 = vmatpush1.msra.mxu0 0.0
    %473 = vmatprep.subr.mxu0 0.0
    %474 = vmatpush1.msra.mxu0 0.0
    %475 = vmatprep.subr.mxu0 0.0
    %476 = vmatpush1.msra.mxu0 0.0
    %477 = vmatprep.subr.mxu0 0.0
    %478 = vmatpush1.msra.mxu0 0.0
    %479 = vmatprep.subr.mxu0 0.0
    %480 = vmatpush1.msra.mxu0 0.0
    %481 = vmatprep.subr.mxu0 0.0
    %482 = vmatpush1.msra.mxu0 0.0
    %483 = vmatprep.subr.mxu0 0.0
    %484 = vmatpush1.msra.mxu0 0.0
    %485 = vmatprep.subr.mxu0 0.0
    %486 = vmatpush1.msra.mxu0 0.0
    %487 = vmatprep.subr.mxu0 0.0
    %488 = vmatpush1.msra.mxu0 0.0
    %489 = vmatprep.subr.mxu0 0.0
    %490 = vmatpush1.msra.mxu0 0.0
    %491 = vmatprep.subr.mxu0 0.0
    %492 = vmatpush1.msra.mxu0 0.0
    %493 = vmatprep.subr.mxu0 0.0
    %494 = vmatpush1.msra.mxu0 0.0
    %495 = vmatprep.subr.mxu0 0.0
    %496 = vmatpush1.msra.mxu0 0.0
    %497 = vmatprep.subr.mxu0 0.0
    %498 = vmatpush1.msra.mxu0 0.0
    %499 = vmatprep.subr.mxu0 0.0
    %500 = vmatpush1.msra.mxu0 0.0
    %501 = vmatprep.mubr.f32.mxu0 0.0
    %502 = vmatmul.mubr.f32.gmra.mrb[0].mxu0 %v411
    %v503 = vpop.f32.mrb[0].mxu0
    %v504 = vadd.f32 %v435, %v503
    %v505 = vpop.f32.mrb[0].mxu0
    %506 = vdwg.mxu0
    %v507 = vtanh.pop %v504
    %s508 = scalar_lea.vmem [#allocation2], 512
    %v509 = vld [vmem:[%s508] sm:$0xff]
    %v510 = vld [vmem:[%s508 + $0x8] sm:$0xff]
    %v511 = vld [vmem:[%s508 + $0x10] sm:$0xff]
    %v512 = vld [vmem:[%s508 + $0x18] sm:$0xff]
    %v513 = vld [vmem:[%s508 + $0x20] sm:$0xff]
    %v514 = vld [vmem:[%s508 + $0x28] sm:$0xff]
    %v515 = vld [vmem:[%s508 + $0x30] sm:$0xff]
    %v516 = vld [vmem:[%s508 + $0x38] sm:$0xff]
    %v517 = vld [vmem:[%s508 + $0x40] sm:$0xff]
    %v518 = vld [vmem:[%s508 + $0x48] sm:$0xff]
    %v519 = vld [vmem:[%s508 + $0x50] sm:$0xff]
    %v520 = vld [vmem:[%s508 + $0x58] sm:$0xff]
    %v521 = vld [vmem:[%s508 + $0x60] sm:$0xff]
    %v522 = vld [vmem:[%s508 + $0x68] sm:$0xff]
    %v523 = vld [vmem:[%s508 + $0x70] sm:$0xff]
    %v524 = vld [vmem:[%s508 + $0x78] sm:$0xff]
    %s525 = scalar_lea.vmem %s4, 4
    %v526 = vld [vmem:[%s525] sm:$0x1]
    %v528 = vlaneseq
    %v529 = vshrl.u32 %v528, 7
    %v530 = vsub.s32 0, %v529
    %v531 = vrot.slane %v526, %v530
    %533 = vmatprep.subr.mxu0 0.0
    %534 = vmatpush1.msra.mxu0 %v509
    %535 = vmatprep.subr.mxu0 0.0
    %536 = vmatpush1.msra.mxu0 %v510
    %537 = vmatprep.subr.mxu0 0.0
    %538 = vmatpush1.msra.mxu0 %v511
    %539 = vmatprep.subr.mxu0 0.0
    %540 = vmatpush1.msra.mxu0 %v512
    %541 = vmatprep.subr.mxu0 0.0
    %542 = vmatpush1.msra.mxu0 %v513
    %543 = vmatprep.subr.mxu0 0.0
    %544 = vmatpush1.msra.mxu0 %v514
    %545 = vmatprep.subr.mxu0 0.0
    %546 = vmatpush1.msra.mxu0 %v515
    %547 = vmatprep.subr.mxu0 0.0
    %548 = vmatpush1.msra.mxu0 %v516
    %549 = vmatprep.subr.mxu0 0.0
    %550 = vmatpush1.msra.mxu0 %v517
    %551 = vmatprep.subr.mxu0 0.0
    %552 = vmatpush1.msra.mxu0 %v518
    %553 = vmatprep.subr.mxu0 0.0
    %554 = vmatpush1.msra.mxu0 %v519
    %555 = vmatprep.subr.mxu0 0.0
    %556 = vmatpush1.msra.mxu0 %v520
    %557 = vmatprep.subr.mxu0 0.0
    %558 = vmatpush1.msra.mxu0 %v521
    %559 = vmatprep.subr.mxu0 0.0
    %560 = vmatpush1.msra.mxu0 %v522
    %561 = vmatprep.subr.mxu0 0.0
    %562 = vmatpush1.msra.mxu0 %v523
    %563 = vmatprep.subr.mxu0 0.0
    %564 = vmatpush1.msra.mxu0 %v524
    %565 = vmatprep.subr.mxu0 0.0
    %566 = vmatpush1.msra.mxu0 0.0
    %567 = vmatprep.subr.mxu0 0.0
    %568 = vmatpush1.msra.mxu0 0.0
    %569 = vmatprep.subr.mxu0 0.0
    %570 = vmatpush1.msra.mxu0 0.0
    %571 = vmatprep.subr.mxu0 0.0
    %572 = vmatpush1.msra.mxu0 0.0
    %573 = vmatprep.subr.mxu0 0.0
    %574 = vmatpush1.msra.mxu0 0.0
    %575 = vmatprep.subr.mxu0 0.0
    %576 = vmatpush1.msra.mxu0 0.0
    %577 = vmatprep.subr.mxu0 0.0
    %578 = vmatpush1.msra.mxu0 0.0
    %579 = vmatprep.subr.mxu0 0.0
    %580 = vmatpush1.msra.mxu0 0.0
    %581 = vmatprep.subr.mxu0 0.0
    %582 = vmatpush1.msra.mxu0 0.0
    %583 = vmatprep.subr.mxu0 0.0
    %584 = vmatpush1.msra.mxu0 0.0
    %585 = vmatprep.subr.mxu0 0.0
    %586 = vmatpush1.msra.mxu0 0.0
    %587 = vmatprep.subr.mxu0 0.0
    %588 = vmatpush1.msra.mxu0 0.0
    %589 = vmatprep.subr.mxu0 0.0
    %590 = vmatpush1.msra.mxu0 0.0
    %591 = vmatprep.subr.mxu0 0.0
    %592 = vmatpush1.msra.mxu0 0.0
    %593 = vmatprep.subr.mxu0 0.0
    %594 = vmatpush1.msra.mxu0 0.0
    %595 = vmatprep.subr.mxu0 0.0
    %596 = vmatpush1.msra.mxu0 0.0
    %597 = vmatprep.mubr.f32.mxu0 0.0
    %598 = vmatmul.mubr.f32.gmra.mrb[0].mxu0 %v507
    %v599 = vpop.f32.mrb[0].mxu0
    %v600 = vadd.f32 %v531, %v599
    %v601 = vpop.f32.mrb[0].mxu0
    %602 = vdwg.mxu0
    %v603 = vtanh.pop %v600
    %v604 = vld [vmem:[%s5] sm:$0xff]
    %v605 = vld [vmem:[%s5 + $0x8] sm:$0xff]
    %v606 = vld [vmem:[%s5 + $0x10] sm:$0xff]
    %v607 = vld [vmem:[%s5 + $0x18] sm:$0xff]
    %v608 = vld [vmem:[%s5 + $0x20] sm:$0xff]
    %v609 = vld [vmem:[%s5 + $0x28] sm:$0xff]
    %v610 = vld [vmem:[%s5 + $0x30] sm:$0xff]
    %v611 = vld [vmem:[%s5 + $0x38] sm:$0xff]
    %v612 = vld [vmem:[%s5 + $0x40] sm:$0xff]
    %v613 = vld [vmem:[%s5 + $0x48] sm:$0xff]
    %v614 = vld [vmem:[%s5 + $0x50] sm:$0xff]
    %v615 = vld [vmem:[%s5 + $0x58] sm:$0xff]
    %v616 = vld [vmem:[%s5 + $0x60] sm:$0xff]
    %v617 = vld [vmem:[%s5 + $0x68] sm:$0xff]
    %v618 = vld [vmem:[%s5 + $0x70] sm:$0xff]
    %v619 = vld [vmem:[%s5 + $0x78] sm:$0xff]
    %v620 = vld [vmem:[%s6] sm:$0x1]
    %v622 = vlaneseq
    %v623 = vshrl.u32 %v622, 7
    %v624 = vsub.s32 0, %v623
    %v625 = vrot.slane %v620, %v624
    %627 = vmatprep.subr.mxu0 0.0
    %628 = vmatpush1.msra.mxu0 %v604
    %629 = vmatprep.subr.mxu0 0.0
    %630 = vmatpush1.msra.mxu0 %v605
    %631 = vmatprep.subr.mxu0 0.0
    %632 = vmatpush1.msra.mxu0 %v606
    %633 = vmatprep.subr.mxu0 0.0
    %634 = vmatpush1.msra.mxu0 %v607
    %635 = vmatprep.subr.mxu0 0.0
    %636 = vmatpush1.msra.mxu0 %v608
    %637 = vmatprep.subr.mxu0 0.0
    %638 = vmatpush1.msra.mxu0 %v609
    %639 = vmatprep.subr.mxu0 0.0
    %640 = vmatpush1.msra.mxu0 %v610
    %641 = vmatprep.subr.mxu0 0.0
    %642 = vmatpush1.msra.mxu0 %v611
    %643 = vmatprep.subr.mxu0 0.0
    %644 = vmatpush1.msra.mxu0 %v612
    %645 = vmatprep.subr.mxu0 0.0
    %646 = vmatpush1.msra.mxu0 %v613
    %647 = vmatprep.subr.mxu0 0.0
    %648 = vmatpush1.msra.mxu0 %v614
    %649 = vmatprep.subr.mxu0 0.0
    %650 = vmatpush1.msra.mxu0 %v615
    %651 = vmatprep.subr.mxu0 0.0
    %652 = vmatpush1.msra.mxu0 %v616
    %653 = vmatprep.subr.mxu0 0.0
    %654 = vmatpush1.msra.mxu0 %v617
    %655 = vmatprep.subr.mxu0 0.0
    %656 = vmatpush1.msra.mxu0 %v618
    %657 = vmatprep.subr.mxu0 0.0
    %658 = vmatpush1.msra.mxu0 %v619
    %659 = vmatprep.subr.mxu0 0.0
    %660 = vmatpush1.msra.mxu0 0.0
    %661 = vmatprep.subr.mxu0 0.0
    %662 = vmatpush1.msra.mxu0 0.0
    %663 = vmatprep.subr.mxu0 0.0
    %664 = vmatpush1.msra.mxu0 0.0
    %665 = vmatprep.subr.mxu0 0.0
    %666 = vmatpush1.msra.mxu0 0.0
    %667 = vmatprep.subr.mxu0 0.0
    %668 = vmatpush1.msra.mxu0 0.0
    %669 = vmatprep.subr.mxu0 0.0
    %670 = vmatpush1.msra.mxu0 0.0
    %671 = vmatprep.subr.mxu0 0.0
    %672 = vmatpush1.msra.mxu0 0.0
    %673 = vmatprep.subr.mxu0 0.0
    %674 = vmatpush1.msra.mxu0 0.0
    %675 = vmatprep.subr.mxu0 0.0
    %676 = vmatpush1.msra.mxu0 0.0
    %677 = vmatprep.subr.mxu0 0.0
    %678 = vmatpush1.msra.mxu0 0.0
    %679 = vmatprep.subr.mxu0 0.0
    %680 = vmatpush1.msra.mxu0 0.0
    %681 = vmatprep.subr.mxu0 0.0
    %682 = vmatpush1.msra.mxu0 0.0
    %683 = vmatprep.subr.mxu0 0.0
    %684 = vmatpush1.msra.mxu0 0.0
    %685 = vmatprep.subr.mxu0 0.0
    %686 = vmatpush1.msra.mxu0 0.0
    %687 = vmatprep.subr.mxu0 0.0
    %688 = vmatpush1.msra.mxu0 0.0
    %689 = vmatprep.subr.mxu0 0.0
    %690 = vmatpush1.msra.mxu0 0.0
    %691 = vmatprep.mubr.f32.mxu0 0.0
    %692 = vmatmul.mubr.f32.gmra.mrb[0].mxu0 %v603
    %v693 = vpop.f32.mrb[0].mxu0
    %v694 = vadd.f32 %v625, %v693
    %v695 = vpop.f32.mrb[0].mxu0
    %696 = vdwg.mxu0
    %vm697 = vcmask 64512
    %698 = vst.msk [vmem:[#allocation5] sm:$0xff] %vm697, %v694
    // Predicated region
    $region34: #{tpu_custom_call.1} parent=1 // pred_check
      _
    $region35: #{tpu_custom_call.1} parent=1 // pred_check_branch
      %700 = sbr.rel (0) target = $region37
    $region36: #{tpu_custom_call.1} parent=1 // pred_region
      %s702 = ssub.s32 128, 128
      %703 = vsyncadd [#allocation4], %s702
      %s705 = sshll.u32 [#allocation5], 4
      %s706 = int_to_ptr.vmem [resolvable:$true] %s705
      %708 = dma.vmem_to_hbm [thread:$0]  %s706, 128, %s7, [#allocation4]
    $region37: #{tpu_custom_call.1} parent=1 // pred_fallthru
      _
    // Predicated region
    $region38: #{tpu_custom_call.1} parent=1 // pred_check
      _
    $region39: #{tpu_custom_call.1} parent=1 // pred_check_branch
      %710 = sbr.rel (0) target = $region41
    $region40: #{tpu_custom_call.1} parent=1 // pred_region
      %711 = dma.done [#allocation4], 128
    $region41: #{tpu_custom_call.1} parent=1 // pred_fallthru
      _
    %712 = vsyncpa [#allocation3], 1
    %713 = vsyncpa [#allocation4], 1

</llo_original>
